<compile_context>
chip_gen: v5e
topology: v5e:2x2
jax: 0.10.0
libtpu: 0.0.40
codegen_flags: <defaults>
</compile_context>

<pallas_src>
import jax
import jax.numpy as jnp
from jax.experimental import pallas as pl
from jax.experimental.pallas import tpu as pltpu


def _round_up(x, m):
    return (x + m - 1) // m * m


# ------------------------- fused LSTM + FC forward ---------------------------

def vanilla_lstm_forward(x, w_packed, dims, batch_first=False):
    """Replicates VanillaLSTM.forward as one fused Pallas kernel.

    x: (T, B, D) if batch_first=False, else (B, T, D).
    w_packed: (R, L) f32 slab from pack_params().
    dims: (D, H, C) logical sizes.
    Returns (T, num_classes) if batch_first=False (PyTorch quirk), else
    (B, num_classes).
    """
    D, H, C = dims
    if batch_first:
        x = jnp.transpose(x, (1, 0, 2))          # -> (T, B, D)
    T, B, _ = x.shape

    Bp = _round_up(B, 8)                          # full sublane tile(s)
    Dp = _round_up(D, 8)
    Hp = _round_up(H, 8)
    G = 4 * H                                     # gate lane extent
    R, L = w_packed.shape                         # packed slab shape
    assert R == Dp + 2 * Hp + 16 and L >= G

    n_out = B if batch_first else T
    n_out_pad = _round_up(n_out, 8)               # == Bp when batch_first

    # slab row offsets (all multiples of 8 -> aligned static slices in-kernel)
    off_wx, off_wh, off_b = 0, Dp, Dp + Hp
    off_fcw, off_fcb = Dp + Hp + 8, Dp + 2 * Hp + 8

    # zero-pad batch + feature dims once in the wrapper (layout plumbing only)
    x_pad = jnp.pad(x.astype(jnp.float32),
                    ((0, 0), (0, Bp - B), (0, Dp - D))).reshape(T * Bp, Dp)

    def kernel(x_ref, w_ref, out_ref, xg_sc, h_sc, c_sc, *maybe_hsel):
        hsel_sc = maybe_hsel[0] if maybe_hsel else None

        # ---- input projection hoisted out of the recurrence -----------------
        # One dense (T*Bp, Dp) x (Dp, L) MXU matmul; bias folded in once.
        wx = w_ref[off_wx:off_wx + Dp, :]
        bias = w_ref[off_b:off_b + 1, :]
        xg_sc[...] = (
            jnp.dot(x_ref[...], wx, preferred_element_type=jnp.float32) + bias)

        # Loop-invariant recurrent weights, loaded into vregs once.
        # TODO(synk): could pin Wh in the MXU via pltpu.matmul_push_rhs /
        # matmul_acc_lhs for an even shorter per-step critical path.
        wh = w_ref[off_wh:off_wh + H, :]          # (H, L)

        h_sc[...] = jnp.zeros_like(h_sc)
        c_sc[...] = jnp.zeros_like(c_sc)
        if hsel_sc is not None:
            hsel_sc[...] = jnp.zeros_like(hsel_sc)

        # ---- recurrence: one (Bp, H) x (H, L) matmul + gate math per step ---
        def step(t, carry):
            h_prev = h_sc[...]
            c_prev = c_sc[...]
            row0 = pl.multiple_of(t * Bp, 8)      # aligned (Bp, L) slice
            gates = xg_sc[pl.ds(row0, Bp), :] + jnp.dot(
                h_prev, wh, preferred_element_type=jnp.float32)
            # gate order [f, i, c, o]; one full-width sigmoid + one tanh.
            sg = jax.nn.sigmoid(gates)
            f = sg[:, 0 * H:1 * H]
            i = sg[:, 1 * H:2 * H]
            o = sg[:, 3 * H:4 * H]
            c_hat = jnp.tanh(gates[:, 2 * H:3 * H])
            c = f * c_prev + i * c_hat
            h = o * jnp.tanh(c)
            c_sc[...] = c
            h_sc[...] = h
            if hsel_sc is not None:
                # batch_first=False quirk: keep the ORIGINAL last batch row
                # (index B-1) of h at every step; padded rows are never read.
                hsel_sc[pl.ds(t, 1), :] = h[B - 1:B, :]
            return carry

        jax.lax.fori_loop(0, T, step, 0, unroll=min(T, 8))

        # ---- fused, lane-dense FC head ---------------------------------------
        fcw = w_ref[off_fcw:off_fcw + H, :]       # (H, L), zero-padded lanes
        fcb = w_ref[off_fcb:off_fcb + 1, :]       # (1, L)
        feats = h_sc[...] if batch_first else hsel_sc[...]
        out_ref[...] = (
            jnp.dot(feats, fcw, preferred_element_type=jnp.float32) + fcb)

    scratch = [
        pltpu.VMEM((T * Bp, L), jnp.float32),     # precomputed x@Wx + b
        pltpu.VMEM((Bp, H), jnp.float32),         # h state
        pltpu.VMEM((Bp, H), jnp.float32),         # c state
    ]
    if not batch_first:
        scratch.append(pltpu.VMEM((n_out_pad, H), jnp.float32))  # selected h

    cost = pl.CostEstimate(
        flops=(2 * T * Bp * Dp * L) + T * (2 * Bp * H * L)
              + (2 * n_out_pad * H * L),
        transcendentals=T * Bp * (L + 2 * H),
        bytes_accessed=4 * (T * Bp * Dp + R * L + n_out_pad * L),
    )

    out = pl.pallas_call(
        kernel,
        out_shape=jax.ShapeDtypeStruct((n_out_pad, L), jnp.float32),
        scratch_shapes=scratch,
        cost_estimate=cost,
        compiler_params=pltpu.CompilerParams(
            vmem_limit_bytes=32 * 1024 * 1024),
    )(x_pad, w_packed)
    return out[:n_out, :C]


# ------------------------------ param init / packing --------------------------

def xavier_uniform(key, shape):
    fan_in, fan_out = shape[0], shape[1]
    bound = (6.0 / (fan_in + fan_out)) ** 0.5
    return jax.random.uniform(key, shape, jnp.float32, -bound, bound)


def init_params(key, input_size, hidden_size, num_classes):
    ks = jax.random.split(key, 10)
    # gate order: f, i, c, o (matches the reference and the packed slab)
    Wxf = xavier_uniform(ks[0], (input_size, hidden_size))
    Wxi = xavier_uniform(ks[1], (input_size, hidden_size))
    Wxc = xavier_uniform(ks[2], (input_size, hidden_size))
    Wxo = xavier_uniform(ks[3], (input_size, hidden_size))
    Whf = xavier_uniform(ks[4], (hidden_size, hidden_size))
    Whi = xavier_uniform(ks[5], (hidden_size, hidden_size))
    Whc = xavier_uniform(ks[6], (hidden_size, hidden_size))
    Who = xavier_uniform(ks[7], (hidden_size, hidden_size))
    b = jnp.zeros((1, 4 * hidden_size), jnp.float32)           # biases -> zeros
    fc_w = xavier_uniform(ks[8], (hidden_size, num_classes))   # stored (H, C)
    fc_b = jax.random.uniform(
        ks[9], (1, num_classes), jnp.float32,
        -1.0 / hidden_size ** 0.5, 1.0 / hidden_size ** 0.5)
    return {
        "wx": jnp.concatenate([Wxf, Wxi, Wxc, Wxo], axis=1),   # (D, 4H)
        "wh": jnp.concatenate([Whf, Whi, Whc, Who], axis=1),   # (H, 4H)
        "b": b,                                                # (1, 4H)
        "fc_w": fc_w,                                          # (H, C)
        "fc_b": fc_b,                                          # (1, C)
    }


def pack_params(params):
    """Pack wx/wh/b/fc_w/fc_b into ONE lane-aligned (R, L) f32 slab.

    Row layout (all block offsets are multiples of 8):
      [0,          Dp)          wx   (D valid rows, 4H valid lanes)
      [Dp,         Dp+Hp)       wh   (H valid rows)
      [Dp+Hp,      Dp+Hp+8)     b    (row 0)
      [Dp+Hp+8,    Dp+2Hp+8)    fc_w (H valid rows, C valid lanes)
      [Dp+2Hp+8,   Dp+2Hp+16)   fc_b (row 0)
    """
    wx, wh, b = params["wx"], params["wh"], params["b"]
    fc_w, fc_b = params["fc_w"], params["fc_b"]
    D, G = wx.shape
    H = wh.shape[0]
    C = fc_w.shape[1]
    Dp, Hp = _round_up(D, 8), _round_up(H, 8)
    L = max(G, _round_up(C, 128), 128)
    R = Dp + 2 * Hp + 16
    slab = jnp.zeros((R, L), jnp.float32)
    slab = slab.at[0:D, 0:G].set(wx)
    slab = slab.at[Dp:Dp + H, 0:G].set(wh)
    slab = slab.at[Dp + Hp, 0:G].set(b[0])
    off_fcw = Dp + Hp + 8
    slab = slab.at[off_fcw:off_fcw + H, 0:C].set(fc_w)
    slab = slab.at[off_fcw + Hp, 0:C].set(fc_b[0])
    return slab, (D, H, C)


# ---------------------------- pure-JAX reference ------------------------------

def reference_forward(x, params, batch_first=False):
    if batch_first:
        x = jnp.transpose(x, (1, 0, 2))
    T, B, D = x.shape
    H = params["wh"].shape[0]

    def step(carry, xt):
        h_prev, c_prev = carry
        g = xt @ params["wx"] + h_prev @ params["wh"] + params["b"]
        f = jax.nn.sigmoid(g[:, 0 * H:1 * H])
        i = jax.nn.sigmoid(g[:, 1 * H:2 * H])
        c_hat = jnp.tanh(g[:, 2 * H:3 * H])
        o = jax.nn.sigmoid(g[:, 3 * H:4 * H])
        c = f * c_prev + i * c_hat
        h = o * jnp.tanh(c)
        return (h, c), h

    init = (jnp.zeros((B, H), jnp.float32), jnp.zeros((B, H), jnp.float32))
    _, h_states = jax.lax.scan(step, init, x)
    out = jnp.transpose(h_states, (1, 0, 2)) if batch_first else h_states
    out = out[:, -1, :]
    return out @ params["fc_w"] + params["fc_b"]


# ----------------------------------- main -------------------------------------

if __name__ == "__main__":
    T, B, D, H, C = 8, 2, 16, 32, 10   # seq, batch, input_size, hidden, classes

    key = jax.random.PRNGKey(0)
    k_x, k_p = jax.random.split(key)
    x = jax.random.normal(k_x, (T, B, D), jnp.float32)
    params = init_params(k_p, D, H, C)
    w_packed, dims = pack_params(params)

    # batch_first=False (module default): output is (T, C) per the PyTorch quirk.
    out = jax.block_until_ready(
        vanilla_lstm_forward(x, w_packed, dims, batch_first=False))
    ref = reference_forward(x, params, batch_first=False)
    assert out.shape == (T, C), out.shape
    assert jnp.allclose(out, ref, atol=1e-5, rtol=1e-5), "mismatch vs reference"

    # batch_first=True path: x is (B, T, D), output is (B, C).
    x_bf = jnp.transpose(x, (1, 0, 2))
    out_bf = jax.block_until_ready(
        vanilla_lstm_forward(x_bf, w_packed, dims, batch_first=True))
    ref_bf = reference_forward(x_bf, params, batch_first=True)
    assert out_bf.shape == (B, C), out_bf.shape
    assert jnp.allclose(out_bf, ref_bf, atol=1e-5, rtol=1e-5), "bf mismatch"

    print("KERNEL_OK")
</pallas_src>

<mosaic_0001>
module attributes {stable_mosaic.version = 11 : i64} {
  func.func @kernel(%arg0: memref<64x16xf32, #tpu.memory_space<vmem>>, %arg1: memref<96x128xf32, #tpu.memory_space<vmem>>, %arg2: memref<8x128xf32, #tpu.memory_space<vmem>>, %arg3: memref<64x128xf32, #tpu.memory_space<vmem>>, %arg4: memref<8x32xf32, #tpu.memory_space<vmem>>, %arg5: memref<8x32xf32, #tpu.memory_space<vmem>>, %arg6: memref<8x32xf32, #tpu.memory_space<vmem>>) attributes {dimension_semantics = [], scalar_prefetch = 0 : i64, scratch_operands = 4 : i64, tpu.core_type = #tpu.core_type<tc>} {
    %c0 = arith.constant 0 : index
    %c0_0 = arith.constant 0 : index
    %0 = vector.load %arg1[%c0, %c0_0] : memref<96x128xf32, #tpu.memory_space<vmem>>, vector<16x128xf32>
    %c48 = arith.constant 48 : index
    %c0_1 = arith.constant 0 : index
    %1 = vector.load %arg1[%c48, %c0_1] : memref<96x128xf32, #tpu.memory_space<vmem>>, vector<1x128xf32>
    %c0_2 = arith.constant 0 : index
    %c0_3 = arith.constant 0 : index
    %2 = vector.load %arg0[%c0_2, %c0_3] : memref<64x16xf32, #tpu.memory_space<vmem>>, vector<64x16xf32>
    %cst = arith.constant dense<0.000000e+00> : vector<64x128xf32>
    %3 = tpu.matmul %2, %0, %cst {dimension_numbers = #tpu.dot_dimension_numbers<[1], [0], [0], [1], [0, 0, 1, 1], [], []>} : vector<64x16xf32>, vector<16x128xf32>, vector<64x128xf32> -> vector<64x128xf32>
    %4 = vector.broadcast %1 : vector<1x128xf32> to vector<64x128xf32>
    %5 = arith.addf %3, %4 : vector<64x128xf32>
    %c0_4 = arith.constant 0 : index
    %c0_5 = arith.constant 0 : index
    %6 = vector.load %arg3[%c0_4, %c0_5] : memref<64x128xf32, #tpu.memory_space<vmem>>, vector<64x128xf32>
    tpu.vector_store %arg3[%c0_4, %c0_5], %5 {strides = array<i32>} : memref<64x128xf32, #tpu.memory_space<vmem>>, vector<64x128xf32>,
    %c16 = arith.constant 16 : index
    %c0_6 = arith.constant 0 : index
    %7 = vector.load %arg1[%c16, %c0_6] : memref<96x128xf32, #tpu.memory_space<vmem>>, vector<32x128xf32>
    %cst_7 = arith.constant 0.000000e+00 : f32
    %8 = vector.broadcast %cst_7 : f32 to vector<8x32xf32>
    %c0_8 = arith.constant 0 : index
    %c0_9 = arith.constant 0 : index
    %9 = vector.load %arg4[%c0_8, %c0_9] : memref<8x32xf32, #tpu.memory_space<vmem>>, vector<8x32xf32>
    tpu.vector_store %arg4[%c0_8, %c0_9], %8 {strides = array<i32>} : memref<8x32xf32, #tpu.memory_space<vmem>>, vector<8x32xf32>,
    %cst_10 = arith.constant 0.000000e+00 : f32
    %10 = vector.broadcast %cst_10 : f32 to vector<8x32xf32>
    %c0_11 = arith.constant 0 : index
    %c0_12 = arith.constant 0 : index
    %11 = vector.load %arg5[%c0_11, %c0_12] : memref<8x32xf32, #tpu.memory_space<vmem>>, vector<8x32xf32>
    tpu.vector_store %arg5[%c0_11, %c0_12], %10 {strides = array<i32>} : memref<8x32xf32, #tpu.memory_space<vmem>>, vector<8x32xf32>,
    %cst_13 = arith.constant 0.000000e+00 : f32
    %12 = vector.broadcast %cst_13 : f32 to vector<8x32xf32>
    %c0_14 = arith.constant 0 : index
    %c0_15 = arith.constant 0 : index
    %13 = vector.load %arg6[%c0_14, %c0_15] : memref<8x32xf32, #tpu.memory_space<vmem>>, vector<8x32xf32>
    tpu.vector_store %arg6[%c0_14, %c0_15], %12 {strides = array<i32>} : memref<8x32xf32, #tpu.memory_space<vmem>>, vector<8x32xf32>,
    %c0_i32 = arith.constant 0 : i32
    %c0_16 = arith.constant 0 : index
    %c0_17 = arith.constant 0 : index
    %14 = vector.load %arg4[%c0_16, %c0_17] : memref<8x32xf32, #tpu.memory_space<vmem>>, vector<8x32xf32>
    %c0_18 = arith.constant 0 : index
    %c0_19 = arith.constant 0 : index
    %15 = vector.load %arg5[%c0_18, %c0_19] : memref<8x32xf32, #tpu.memory_space<vmem>>, vector<8x32xf32>
    %c8_i32 = arith.constant 8 : i32
    %16 = arith.muli %c0_i32, %c8_i32 : i32
    %17 = tpu.assume_multiple %16, 8 : i32
    %18 = arith.index_cast %17 : i32 to index
    %c0_20 = arith.constant 0 : index
    %19 = vector.load %arg3[%18, %c0_20] : memref<64x128xf32, #tpu.memory_space<vmem>>, vector<8x128xf32>
    %cst_21 = arith.constant dense<0.000000e+00> : vector<8x128xf32>
    %20 = tpu.matmul %14, %7, %cst_21 {dimension_numbers = #tpu.dot_dimension_numbers<[1], [0], [0], [1], [0, 0, 1, 1], [], []>} : vector<8x32xf32>, vector<32x128xf32>, vector<8x128xf32> -> vector<8x128xf32>
    %21 = arith.addf %19, %20 : vector<8x128xf32>
    %22 = arith.negf %21 : vector<8x128xf32>
    %23 = math.exp %22 : vector<8x128xf32>
    %cst_22 = arith.constant 1.000000e+00 : f32
    %24 = vector.broadcast %cst_22 : f32 to vector<8x128xf32>
    %25 = arith.addf %24, %23 : vector<8x128xf32>
    %26 = arith.divf %24, %25 : vector<8x128xf32>
    %27 = vector.extract_strided_slice %26 {offsets = [0, 0], sizes = [8, 32], strides = [1, 1]} : vector<8x128xf32> to vector<8x32xf32>
    %28 = vector.extract_strided_slice %26 {offsets = [0, 32], sizes = [8, 32], strides = [1, 1]} : vector<8x128xf32> to vector<8x32xf32>
    %29 = vector.extract_strided_slice %26 {offsets = [0, 96], sizes = [8, 32], strides = [1, 1]} : vector<8x128xf32> to vector<8x32xf32>
    %30 = vector.extract_strided_slice %21 {offsets = [0, 64], sizes = [8, 32], strides = [1, 1]} : vector<8x128xf32> to vector<8x32xf32>
    %31 = math.tanh %30 : vector<8x32xf32>
    %32 = arith.mulf %27, %15 : vector<8x32xf32>
    %33 = arith.mulf %28, %31 : vector<8x32xf32>
    %34 = arith.addf %32, %33 : vector<8x32xf32>
    %35 = math.tanh %34 : vector<8x32xf32>
    %36 = arith.mulf %29, %35 : vector<8x32xf32>
    %c0_23 = arith.constant 0 : index
    %c0_24 = arith.constant 0 : index
    %37 = vector.load %arg5[%c0_23, %c0_24] : memref<8x32xf32, #tpu.memory_space<vmem>>, vector<8x32xf32>
    tpu.vector_store %arg5[%c0_23, %c0_24], %34 {strides = array<i32>} : memref<8x32xf32, #tpu.memory_space<vmem>>, vector<8x32xf32>,
    %c0_25 = arith.constant 0 : index
    %c0_26 = arith.constant 0 : index
    %38 = vector.load %arg4[%c0_25, %c0_26] : memref<8x32xf32, #tpu.memory_space<vmem>>, vector<8x32xf32>
    tpu.vector_store %arg4[%c0_25, %c0_26], %36 {strides = array<i32>} : memref<8x32xf32, #tpu.memory_space<vmem>>, vector<8x32xf32>,
    %39 = vector.extract_strided_slice %36 {offsets = [1, 0], sizes = [1, 32], strides = [1, 1]} : vector<8x32xf32> to vector<1x32xf32>
    %40 = arith.index_cast %c0_i32 : i32 to index
    %c0_27 = arith.constant 0 : index
    %41 = vector.load %arg6[%40, %c0_27] : memref<8x32xf32, #tpu.memory_space<vmem>>, vector<1x32xf32>
    tpu.vector_store %arg6[%40, %c0_27], %39 {strides = array<i32>} : memref<8x32xf32, #tpu.memory_space<vmem>>, vector<1x32xf32>,
    %c1_i32 = arith.constant 1 : i32
    %c0_28 = arith.constant 0 : index
    %c0_29 = arith.constant 0 : index
    %42 = vector.load %arg4[%c0_28, %c0_29] : memref<8x32xf32, #tpu.memory_space<vmem>>, vector<8x32xf32>
    %c0_30 = arith.constant 0 : index
    %c0_31 = arith.constant 0 : index
    %43 = vector.load %arg5[%c0_30, %c0_31] : memref<8x32xf32, #tpu.memory_space<vmem>>, vector<8x32xf32>
    %c8_i32_32 = arith.constant 8 : i32
    %44 = arith.muli %c1_i32, %c8_i32_32 : i32
    %45 = tpu.assume_multiple %44, 8 : i32
    %46 = arith.index_cast %45 : i32 to index
    %c0_33 = arith.constant 0 : index
    %47 = vector.load %arg3[%46, %c0_33] : memref<64x128xf32, #tpu.memory_space<vmem>>, vector<8x128xf32>
    %cst_34 = arith.constant dense<0.000000e+00> : vector<8x128xf32>
    %48 = tpu.matmul %42, %7, %cst_34 {dimension_numbers = #tpu.dot_dimension_numbers<[1], [0], [0], [1], [0, 0, 1, 1], [], []>} : vector<8x32xf32>, vector<32x128xf32>, vector<8x128xf32> -> vector<8x128xf32>
    %49 = arith.addf %47, %48 : vector<8x128xf32>
    %50 = arith.negf %49 : vector<8x128xf32>
    %51 = math.exp %50 : vector<8x128xf32>
    %cst_35 = arith.constant 1.000000e+00 : f32
    %52 = vector.broadcast %cst_35 : f32 to vector<8x128xf32>
    %53 = arith.addf %52, %51 : vector<8x128xf32>
    %54 = arith.divf %52, %53 : vector<8x128xf32>
    %55 = vector.extract_strided_slice %54 {offsets = [0, 0], sizes = [8, 32], strides = [1, 1]} : vector<8x128xf32> to vector<8x32xf32>
    %56 = vector.extract_strided_slice %54 {offsets = [0, 32], sizes = [8, 32], strides = [1, 1]} : vector<8x128xf32> to vector<8x32xf32>
    %57 = vector.extract_strided_slice %54 {offsets = [0, 96], sizes = [8, 32], strides = [1, 1]} : vector<8x128xf32> to vector<8x32xf32>
    %58 = vector.extract_strided_slice %49 {offsets = [0, 64], sizes = [8, 32], strides = [1, 1]} : vector<8x128xf32> to vector<8x32xf32>
    %59 = math.tanh %58 : vector<8x32xf32>
    %60 = arith.mulf %55, %43 : vector<8x32xf32>
    %61 = arith.mulf %56, %59 : vector<8x32xf32>
    %62 = arith.addf %60, %61 : vector<8x32xf32>
    %63 = math.tanh %62 : vector<8x32xf32>
    %64 = arith.mulf %57, %63 : vector<8x32xf32>
    %c0_36 = arith.constant 0 : index
    %c0_37 = arith.constant 0 : index
    %65 = vector.load %arg5[%c0_36, %c0_37] : memref<8x32xf32, #tpu.memory_space<vmem>>, vector<8x32xf32>
    tpu.vector_store %arg5[%c0_36, %c0_37], %62 {strides = array<i32>} : memref<8x32xf32, #tpu.memory_space<vmem>>, vector<8x32xf32>,
    %c0_38 = arith.constant 0 : index
    %c0_39 = arith.constant 0 : index
    %66 = vector.load %arg4[%c0_38, %c0_39] : memref<8x32xf32, #tpu.memory_space<vmem>>, vector<8x32xf32>
    tpu.vector_store %arg4[%c0_38, %c0_39], %64 {strides = array<i32>} : memref<8x32xf32, #tpu.memory_space<vmem>>, vector<8x32xf32>,
    %67 = vector.extract_strided_slice %64 {offsets = [1, 0], sizes = [1, 32], strides = [1, 1]} : vector<8x32xf32> to vector<1x32xf32>
    %68 = arith.index_cast %c1_i32 : i32 to index
    %c0_40 = arith.constant 0 : index
    %69 = vector.load %arg6[%68, %c0_40] : memref<8x32xf32, #tpu.memory_space<vmem>>, vector<1x32xf32>
    tpu.vector_store %arg6[%68, %c0_40], %67 {strides = array<i32>} : memref<8x32xf32, #tpu.memory_space<vmem>>, vector<1x32xf32>,
    %c2_i32 = arith.constant 2 : i32
    %c0_41 = arith.constant 0 : index
    %c0_42 = arith.constant 0 : index
    %70 = vector.load %arg4[%c0_41, %c0_42] : memref<8x32xf32, #tpu.memory_space<vmem>>, vector<8x32xf32>
    %c0_43 = arith.constant 0 : index
    %c0_44 = arith.constant 0 : index
    %71 = vector.load %arg5[%c0_43, %c0_44] : memref<8x32xf32, #tpu.memory_space<vmem>>, vector<8x32xf32>
    %c8_i32_45 = arith.constant 8 : i32
    %72 = arith.muli %c2_i32, %c8_i32_45 : i32
    %73 = tpu.assume_multiple %72, 8 : i32
    %74 = arith.index_cast %73 : i32 to index
    %c0_46 = arith.constant 0 : index
    %75 = vector.load %arg3[%74, %c0_46] : memref<64x128xf32, #tpu.memory_space<vmem>>, vector<8x128xf32>
    %cst_47 = arith.constant dense<0.000000e+00> : vector<8x128xf32>
    %76 = tpu.matmul %70, %7, %cst_47 {dimension_numbers = #tpu.dot_dimension_numbers<[1], [0], [0], [1], [0, 0, 1, 1], [], []>} : vector<8x32xf32>, vector<32x128xf32>, vector<8x128xf32> -> vector<8x128xf32>
    %77 = arith.addf %75, %76 : vector<8x128xf32>
    %78 = arith.negf %77 : vector<8x128xf32>
    %79 = math.exp %78 : vector<8x128xf32>
    %cst_48 = arith.constant 1.000000e+00 : f32
    %80 = vector.broadcast %cst_48 : f32 to vector<8x128xf32>
    %81 = arith.addf %80, %79 : vector<8x128xf32>
    %82 = arith.divf %80, %81 : vector<8x128xf32>
    %83 = vector.extract_strided_slice %82 {offsets = [0, 0], sizes = [8, 32], strides = [1, 1]} : vector<8x128xf32> to vector<8x32xf32>
    %84 = vector.extract_strided_slice %82 {offsets = [0, 32], sizes = [8, 32], strides = [1, 1]} : vector<8x128xf32> to vector<8x32xf32>
    %85 = vector.extract_strided_slice %82 {offsets = [0, 96], sizes = [8, 32], strides = [1, 1]} : vector<8x128xf32> to vector<8x32xf32>
    %86 = vector.extract_strided_slice %77 {offsets = [0, 64], sizes = [8, 32], strides = [1, 1]} : vector<8x128xf32> to vector<8x32xf32>
    %87 = math.tanh %86 : vector<8x32xf32>
    %88 = arith.mulf %83, %71 : vector<8x32xf32>
    %89 = arith.mulf %84, %87 : vector<8x32xf32>
    %90 = arith.addf %88, %89 : vector<8x32xf32>
    %91 = math.tanh %90 : vector<8x32xf32>
    %92 = arith.mulf %85, %91 : vector<8x32xf32>
    %c0_49 = arith.constant 0 : index
    %c0_50 = arith.constant 0 : index
    %93 = vector.load %arg5[%c0_49, %c0_50] : memref<8x32xf32, #tpu.memory_space<vmem>>, vector<8x32xf32>
    tpu.vector_store %arg5[%c0_49, %c0_50], %90 {strides = array<i32>} : memref<8x32xf32, #tpu.memory_space<vmem>>, vector<8x32xf32>,
    %c0_51 = arith.constant 0 : index
    %c0_52 = arith.constant 0 : index
    %94 = vector.load %arg4[%c0_51, %c0_52] : memref<8x32xf32, #tpu.memory_space<vmem>>, vector<8x32xf32>
    tpu.vector_store %arg4[%c0_51, %c0_52], %92 {strides = array<i32>} : memref<8x32xf32, #tpu.memory_space<vmem>>, vector<8x32xf32>,
    %95 = vector.extract_strided_slice %92 {offsets = [1, 0], sizes = [1, 32], strides = [1, 1]} : vector<8x32xf32> to vector<1x32xf32>
    %96 = arith.index_cast %c2_i32 : i32 to index
    %c0_53 = arith.constant 0 : index
    %97 = vector.load %arg6[%96, %c0_53] : memref<8x32xf32, #tpu.memory_space<vmem>>, vector<1x32xf32>
    tpu.vector_store %arg6[%96, %c0_53], %95 {strides = array<i32>} : memref<8x32xf32, #tpu.memory_space<vmem>>, vector<1x32xf32>,
    %c3_i32 = arith.constant 3 : i32
    %c0_54 = arith.constant 0 : index
    %c0_55 = arith.constant 0 : index
    %98 = vector.load %arg4[%c0_54, %c0_55] : memref<8x32xf32, #tpu.memory_space<vmem>>, vector<8x32xf32>
    %c0_56 = arith.constant 0 : index
    %c0_57 = arith.constant 0 : index
    %99 = vector.load %arg5[%c0_56, %c0_57] : memref<8x32xf32, #tpu.memory_space<vmem>>, vector<8x32xf32>
    %c8_i32_58 = arith.constant 8 : i32
    %100 = arith.muli %c3_i32, %c8_i32_58 : i32
    %101 = tpu.assume_multiple %100, 8 : i32
    %102 = arith.index_cast %101 : i32 to index
    %c0_59 = arith.constant 0 : index
    %103 = vector.load %arg3[%102, %c0_59] : memref<64x128xf32, #tpu.memory_space<vmem>>, vector<8x128xf32>
    %cst_60 = arith.constant dense<0.000000e+00> : vector<8x128xf32>
    %104 = tpu.matmul %98, %7, %cst_60 {dimension_numbers = #tpu.dot_dimension_numbers<[1], [0], [0], [1], [0, 0, 1, 1], [], []>} : vector<8x32xf32>, vector<32x128xf32>, vector<8x128xf32> -> vector<8x128xf32>
    %105 = arith.addf %103, %104 : vector<8x128xf32>
    %106 = arith.negf %105 : vector<8x128xf32>
    %107 = math.exp %106 : vector<8x128xf32>
    %cst_61 = arith.constant 1.000000e+00 : f32
    %108 = vector.broadcast %cst_61 : f32 to vector<8x128xf32>
    %109 = arith.addf %108, %107 : vector<8x128xf32>
    %110 = arith.divf %108, %109 : vector<8x128xf32>
    %111 = vector.extract_strided_slice %110 {offsets = [0, 0], sizes = [8, 32], strides = [1, 1]} : vector<8x128xf32> to vector<8x32xf32>
    %112 = vector.extract_strided_slice %110 {offsets = [0, 32], sizes = [8, 32], strides = [1, 1]} : vector<8x128xf32> to vector<8x32xf32>
    %113 = vector.extract_strided_slice %110 {offsets = [0, 96], sizes = [8, 32], strides = [1, 1]} : vector<8x128xf32> to vector<8x32xf32>
    %114 = vector.extract_strided_slice %105 {offsets = [0, 64], sizes = [8, 32], strides = [1, 1]} : vector<8x128xf32> to vector<8x32xf32>
    %115 = math.tanh %114 : vector<8x32xf32>
    %116 = arith.mulf %111, %99 : vector<8x32xf32>
    %117 = arith.mulf %112, %115 : vector<8x32xf32>
    %118 = arith.addf %116, %117 : vector<8x32xf32>
    %119 = math.tanh %118 : vector<8x32xf32>
    %120 = arith.mulf %113, %119 : vector<8x32xf32>
    %c0_62 = arith.constant 0 : index
    %c0_63 = arith.constant 0 : index
    %121 = vector.load %arg5[%c0_62, %c0_63] : memref<8x32xf32, #tpu.memory_space<vmem>>, vector<8x32xf32>
    tpu.vector_store %arg5[%c0_62, %c0_63], %118 {strides = array<i32>} : memref<8x32xf32, #tpu.memory_space<vmem>>, vector<8x32xf32>,
    %c0_64 = arith.constant 0 : index
    %c0_65 = arith.constant 0 : index
    %122 = vector.load %arg4[%c0_64, %c0_65] : memref<8x32xf32, #tpu.memory_space<vmem>>, vector<8x32xf32>
    tpu.vector_store %arg4[%c0_64, %c0_65], %120 {strides = array<i32>} : memref<8x32xf32, #tpu.memory_space<vmem>>, vector<8x32xf32>,
    %123 = vector.extract_strided_slice %120 {offsets = [1, 0], sizes = [1, 32], strides = [1, 1]} : vector<8x32xf32> to vector<1x32xf32>
    %124 = arith.index_cast %c3_i32 : i32 to index
    %c0_66 = arith.constant 0 : index
    %125 = vector.load %arg6[%124, %c0_66] : memref<8x32xf32, #tpu.memory_space<vmem>>, vector<1x32xf32>
    tpu.vector_store %arg6[%124, %c0_66], %123 {strides = array<i32>} : memref<8x32xf32, #tpu.memory_space<vmem>>, vector<1x32xf32>,
    %c4_i32 = arith.constant 4 : i32
    %c0_67 = arith.constant 0 : index
    %c0_68 = arith.constant 0 : index
    %126 = vector.load %arg4[%c0_67, %c0_68] : memref<8x32xf32, #tpu.memory_space<vmem>>, vector<8x32xf32>
    %c0_69 = arith.constant 0 : index
    %c0_70 = arith.constant 0 : index
    %127 = vector.load %arg5[%c0_69, %c0_70] : memref<8x32xf32, #tpu.memory_space<vmem>>, vector<8x32xf32>
    %c8_i32_71 = arith.constant 8 : i32
    %128 = arith.muli %c4_i32, %c8_i32_71 : i32
    %129 = tpu.assume_multiple %128, 8 : i32
    %130 = arith.index_cast %129 : i32 to index
    %c0_72 = arith.constant 0 : index
    %131 = vector.load %arg3[%130, %c0_72] : memref<64x128xf32, #tpu.memory_space<vmem>>, vector<8x128xf32>
    %cst_73 = arith.constant dense<0.000000e+00> : vector<8x128xf32>
    %132 = tpu.matmul %126, %7, %cst_73 {dimension_numbers = #tpu.dot_dimension_numbers<[1], [0], [0], [1], [0, 0, 1, 1], [], []>} : vector<8x32xf32>, vector<32x128xf32>, vector<8x128xf32> -> vector<8x128xf32>
    %133 = arith.addf %131, %132 : vector<8x128xf32>
    %134 = arith.negf %133 : vector<8x128xf32>
    %135 = math.exp %134 : vector<8x128xf32>
    %cst_74 = arith.constant 1.000000e+00 : f32
    %136 = vector.broadcast %cst_74 : f32 to vector<8x128xf32>
    %137 = arith.addf %136, %135 : vector<8x128xf32>
    %138 = arith.divf %136, %137 : vector<8x128xf32>
    %139 = vector.extract_strided_slice %138 {offsets = [0, 0], sizes = [8, 32], strides = [1, 1]} : vector<8x128xf32> to vector<8x32xf32>
    %140 = vector.extract_strided_slice %138 {offsets = [0, 32], sizes = [8, 32], strides = [1, 1]} : vector<8x128xf32> to vector<8x32xf32>
    %141 = vector.extract_strided_slice %138 {offsets = [0, 96], sizes = [8, 32], strides = [1, 1]} : vector<8x128xf32> to vector<8x32xf32>
    %142 = vector.extract_strided_slice %133 {offsets = [0, 64], sizes = [8, 32], strides = [1, 1]} : vector<8x128xf32> to vector<8x32xf32>
    %143 = math.tanh %142 : vector<8x32xf32>
    %144 = arith.mulf %139, %127 : vector<8x32xf32>
    %145 = arith.mulf %140, %143 : vector<8x32xf32>
    %146 = arith.addf %144, %145 : vector<8x32xf32>
    %147 = math.tanh %146 : vector<8x32xf32>
    %148 = arith.mulf %141, %147 : vector<8x32xf32>
    %c0_75 = arith.constant 0 : index
    %c0_76 = arith.constant 0 : index
    %149 = vector.load %arg5[%c0_75, %c0_76] : memref<8x32xf32, #tpu.memory_space<vmem>>, vector<8x32xf32>
    tpu.vector_store %arg5[%c0_75, %c0_76], %146 {strides = array<i32>} : memref<8x32xf32, #tpu.memory_space<vmem>>, vector<8x32xf32>,
    %c0_77 = arith.constant 0 : index
    %c0_78 = arith.constant 0 : index
    %150 = vector.load %arg4[%c0_77, %c0_78] : memref<8x32xf32, #tpu.memory_space<vmem>>, vector<8x32xf32>
    tpu.vector_store %arg4[%c0_77, %c0_78], %148 {strides = array<i32>} : memref<8x32xf32, #tpu.memory_space<vmem>>, vector<8x32xf32>,
    %151 = vector.extract_strided_slice %148 {offsets = [1, 0], sizes = [1, 32], strides = [1, 1]} : vector<8x32xf32> to vector<1x32xf32>
    %152 = arith.index_cast %c4_i32 : i32 to index
    %c0_79 = arith.constant 0 : index
    %153 = vector.load %arg6[%152, %c0_79] : memref<8x32xf32, #tpu.memory_space<vmem>>, vector<1x32xf32>
    tpu.vector_store %arg6[%152, %c0_79], %151 {strides = array<i32>} : memref<8x32xf32, #tpu.memory_space<vmem>>, vector<1x32xf32>,
    %c5_i32 = arith.constant 5 : i32
    %c0_80 = arith.constant 0 : index
    %c0_81 = arith.constant 0 : index
    %154 = vector.load %arg4[%c0_80, %c0_81] : memref<8x32xf32, #tpu.memory_space<vmem>>, vector<8x32xf32>
    %c0_82 = arith.constant 0 : index
    %c0_83 = arith.constant 0 : index
    %155 = vector.load %arg5[%c0_82, %c0_83] : memref<8x32xf32, #tpu.memory_space<vmem>>, vector<8x32xf32>
    %c8_i32_84 = arith.constant 8 : i32
    %156 = arith.muli %c5_i32, %c8_i32_84 : i32
    %157 = tpu.assume_multiple %156, 8 : i32
    %158 = arith.index_cast %157 : i32 to index
    %c0_85 = arith.constant 0 : index
    %159 = vector.load %arg3[%158, %c0_85] : memref<64x128xf32, #tpu.memory_space<vmem>>, vector<8x128xf32>
    %cst_86 = arith.constant dense<0.000000e+00> : vector<8x128xf32>
    %160 = tpu.matmul %154, %7, %cst_86 {dimension_numbers = #tpu.dot_dimension_numbers<[1], [0], [0], [1], [0, 0, 1, 1], [], []>} : vector<8x32xf32>, vector<32x128xf32>, vector<8x128xf32> -> vector<8x128xf32>
    %161 = arith.addf %159, %160 : vector<8x128xf32>
    %162 = arith.negf %161 : vector<8x128xf32>
    %163 = math.exp %162 : vector<8x128xf32>
    %cst_87 = arith.constant 1.000000e+00 : f32
    %164 = vector.broadcast %cst_87 : f32 to vector<8x128xf32>
    %165 = arith.addf %164, %163 : vector<8x128xf32>
    %166 = arith.divf %164, %165 : vector<8x128xf32>
    %167 = vector.extract_strided_slice %166 {offsets = [0, 0], sizes = [8, 32], strides = [1, 1]} : vector<8x128xf32> to vector<8x32xf32>
    %168 = vector.extract_strided_slice %166 {offsets = [0, 32], sizes = [8, 32], strides = [1, 1]} : vector<8x128xf32> to vector<8x32xf32>
    %169 = vector.extract_strided_slice %166 {offsets = [0, 96], sizes = [8, 32], strides = [1, 1]} : vector<8x128xf32> to vector<8x32xf32>
    %170 = vector.extract_strided_slice %161 {offsets = [0, 64], sizes = [8, 32], strides = [1, 1]} : vector<8x128xf32> to vector<8x32xf32>
    %171 = math.tanh %170 : vector<8x32xf32>
    %172 = arith.mulf %167, %155 : vector<8x32xf32>
    %173 = arith.mulf %168, %171 : vector<8x32xf32>
    %174 = arith.addf %172, %173 : vector<8x32xf32>
    %175 = math.tanh %174 : vector<8x32xf32>
    %176 = arith.mulf %169, %175 : vector<8x32xf32>
    %c0_88 = arith.constant 0 : index
    %c0_89 = arith.constant 0 : index
    %177 = vector.load %arg5[%c0_88, %c0_89] : memref<8x32xf32, #tpu.memory_space<vmem>>, vector<8x32xf32>
    tpu.vector_store %arg5[%c0_88, %c0_89], %174 {strides = array<i32>} : memref<8x32xf32, #tpu.memory_space<vmem>>, vector<8x32xf32>,
    %c0_90 = arith.constant 0 : index
    %c0_91 = arith.constant 0 : index
    %178 = vector.load %arg4[%c0_90, %c0_91] : memref<8x32xf32, #tpu.memory_space<vmem>>, vector<8x32xf32>
    tpu.vector_store %arg4[%c0_90, %c0_91], %176 {strides = array<i32>} : memref<8x32xf32, #tpu.memory_space<vmem>>, vector<8x32xf32>,
    %179 = vector.extract_strided_slice %176 {offsets = [1, 0], sizes = [1, 32], strides = [1, 1]} : vector<8x32xf32> to vector<1x32xf32>
    %180 = arith.index_cast %c5_i32 : i32 to index
    %c0_92 = arith.constant 0 : index
    %181 = vector.load %arg6[%180, %c0_92] : memref<8x32xf32, #tpu.memory_space<vmem>>, vector<1x32xf32>
    tpu.vector_store %arg6[%180, %c0_92], %179 {strides = array<i32>} : memref<8x32xf32, #tpu.memory_space<vmem>>, vector<1x32xf32>,
    %c6_i32 = arith.constant 6 : i32
    %c0_93 = arith.constant 0 : index
    %c0_94 = arith.constant 0 : index
    %182 = vector.load %arg4[%c0_93, %c0_94] : memref<8x32xf32, #tpu.memory_space<vmem>>, vector<8x32xf32>
    %c0_95 = arith.constant 0 : index
    %c0_96 = arith.constant 0 : index
    %183 = vector.load %arg5[%c0_95, %c0_96] : memref<8x32xf32, #tpu.memory_space<vmem>>, vector<8x32xf32>
    %c8_i32_97 = arith.constant 8 : i32
    %184 = arith.muli %c6_i32, %c8_i32_97 : i32
    %185 = tpu.assume_multiple %184, 8 : i32
    %186 = arith.index_cast %185 : i32 to index
    %c0_98 = arith.constant 0 : index
    %187 = vector.load %arg3[%186, %c0_98] : memref<64x128xf32, #tpu.memory_space<vmem>>, vector<8x128xf32>
    %cst_99 = arith.constant dense<0.000000e+00> : vector<8x128xf32>
    %188 = tpu.matmul %182, %7, %cst_99 {dimension_numbers = #tpu.dot_dimension_numbers<[1], [0], [0], [1], [0, 0, 1, 1], [], []>} : vector<8x32xf32>, vector<32x128xf32>, vector<8x128xf32> -> vector<8x128xf32>
    %189 = arith.addf %187, %188 : vector<8x128xf32>
    %190 = arith.negf %189 : vector<8x128xf32>
    %191 = math.exp %190 : vector<8x128xf32>
    %cst_100 = arith.constant 1.000000e+00 : f32
    %192 = vector.broadcast %cst_100 : f32 to vector<8x128xf32>
    %193 = arith.addf %192, %191 : vector<8x128xf32>
    %194 = arith.divf %192, %193 : vector<8x128xf32>
    %195 = vector.extract_strided_slice %194 {offsets = [0, 0], sizes = [8, 32], strides = [1, 1]} : vector<8x128xf32> to vector<8x32xf32>
    %196 = vector.extract_strided_slice %194 {offsets = [0, 32], sizes = [8, 32], strides = [1, 1]} : vector<8x128xf32> to vector<8x32xf32>
    %197 = vector.extract_strided_slice %194 {offsets = [0, 96], sizes = [8, 32], strides = [1, 1]} : vector<8x128xf32> to vector<8x32xf32>
    %198 = vector.extract_strided_slice %189 {offsets = [0, 64], sizes = [8, 32], strides = [1, 1]} : vector<8x128xf32> to vector<8x32xf32>
    %199 = math.tanh %198 : vector<8x32xf32>
    %200 = arith.mulf %195, %183 : vector<8x32xf32>
    %201 = arith.mulf %196, %199 : vector<8x32xf32>
    %202 = arith.addf %200, %201 : vector<8x32xf32>
    %203 = math.tanh %202 : vector<8x32xf32>
    %204 = arith.mulf %197, %203 : vector<8x32xf32>
    %c0_101 = arith.constant 0 : index
    %c0_102 = arith.constant 0 : index
    %205 = vector.load %arg5[%c0_101, %c0_102] : memref<8x32xf32, #tpu.memory_space<vmem>>, vector<8x32xf32>
    tpu.vector_store %arg5[%c0_101, %c0_102], %202 {strides = array<i32>} : memref<8x32xf32, #tpu.memory_space<vmem>>, vector<8x32xf32>,
    %c0_103 = arith.constant 0 : index
    %c0_104 = arith.constant 0 : index
    %206 = vector.load %arg4[%c0_103, %c0_104] : memref<8x32xf32, #tpu.memory_space<vmem>>, vector<8x32xf32>
    tpu.vector_store %arg4[%c0_103, %c0_104], %204 {strides = array<i32>} : memref<8x32xf32, #tpu.memory_space<vmem>>, vector<8x32xf32>,
    %207 = vector.extract_strided_slice %204 {offsets = [1, 0], sizes = [1, 32], strides = [1, 1]} : vector<8x32xf32> to vector<1x32xf32>
    %208 = arith.index_cast %c6_i32 : i32 to index
    %c0_105 = arith.constant 0 : index
    %209 = vector.load %arg6[%208, %c0_105] : memref<8x32xf32, #tpu.memory_space<vmem>>, vector<1x32xf32>
    tpu.vector_store %arg6[%208, %c0_105], %207 {strides = array<i32>} : memref<8x32xf32, #tpu.memory_space<vmem>>, vector<1x32xf32>,
    %c7_i32 = arith.constant 7 : i32
    %c0_106 = arith.constant 0 : index
    %c0_107 = arith.constant 0 : index
    %210 = vector.load %arg4[%c0_106, %c0_107] : memref<8x32xf32, #tpu.memory_space<vmem>>, vector<8x32xf32>
    %c0_108 = arith.constant 0 : index
    %c0_109 = arith.constant 0 : index
    %211 = vector.load %arg5[%c0_108, %c0_109] : memref<8x32xf32, #tpu.memory_space<vmem>>, vector<8x32xf32>
    %c8_i32_110 = arith.constant 8 : i32
    %212 = arith.muli %c7_i32, %c8_i32_110 : i32
    %213 = tpu.assume_multiple %212, 8 : i32
    %214 = arith.index_cast %213 : i32 to index
    %c0_111 = arith.constant 0 : index
    %215 = vector.load %arg3[%214, %c0_111] : memref<64x128xf32, #tpu.memory_space<vmem>>, vector<8x128xf32>
    %cst_112 = arith.constant dense<0.000000e+00> : vector<8x128xf32>
    %216 = tpu.matmul %210, %7, %cst_112 {dimension_numbers = #tpu.dot_dimension_numbers<[1], [0], [0], [1], [0, 0, 1, 1], [], []>} : vector<8x32xf32>, vector<32x128xf32>, vector<8x128xf32> -> vector<8x128xf32>
    %217 = arith.addf %215, %216 : vector<8x128xf32>
    %218 = arith.negf %217 : vector<8x128xf32>
    %219 = math.exp %218 : vector<8x128xf32>
    %cst_113 = arith.constant 1.000000e+00 : f32
    %220 = vector.broadcast %cst_113 : f32 to vector<8x128xf32>
    %221 = arith.addf %220, %219 : vector<8x128xf32>
    %222 = arith.divf %220, %221 : vector<8x128xf32>
    %223 = vector.extract_strided_slice %222 {offsets = [0, 0], sizes = [8, 32], strides = [1, 1]} : vector<8x128xf32> to vector<8x32xf32>
    %224 = vector.extract_strided_slice %222 {offsets = [0, 32], sizes = [8, 32], strides = [1, 1]} : vector<8x128xf32> to vector<8x32xf32>
    %225 = vector.extract_strided_slice %222 {offsets = [0, 96], sizes = [8, 32], strides = [1, 1]} : vector<8x128xf32> to vector<8x32xf32>
    %226 = vector.extract_strided_slice %217 {offsets = [0, 64], sizes = [8, 32], strides = [1, 1]} : vector<8x128xf32> to vector<8x32xf32>
    %227 = math.tanh %226 : vector<8x32xf32>
    %228 = arith.mulf %223, %211 : vector<8x32xf32>
    %229 = arith.mulf %224, %227 : vector<8x32xf32>
    %230 = arith.addf %228, %229 : vector<8x32xf32>
    %231 = math.tanh %230 : vector<8x32xf32>
    %232 = arith.mulf %225, %231 : vector<8x32xf32>
    %c0_114 = arith.constant 0 : index
    %c0_115 = arith.constant 0 : index
    %233 = vector.load %arg5[%c0_114, %c0_115] : memref<8x32xf32, #tpu.memory_space<vmem>>, vector<8x32xf32>
    tpu.vector_store %arg5[%c0_114, %c0_115], %230 {strides = array<i32>} : memref<8x32xf32, #tpu.memory_space<vmem>>, vector<8x32xf32>,
    %c0_116 = arith.constant 0 : index
    %c0_117 = arith.constant 0 : index
    %234 = vector.load %arg4[%c0_116, %c0_117] : memref<8x32xf32, #tpu.memory_space<vmem>>, vector<8x32xf32>
    tpu.vector_store %arg4[%c0_116, %c0_117], %232 {strides = array<i32>} : memref<8x32xf32, #tpu.memory_space<vmem>>, vector<8x32xf32>,
    %235 = vector.extract_strided_slice %232 {offsets = [1, 0], sizes = [1, 32], strides = [1, 1]} : vector<8x32xf32> to vector<1x32xf32>
    %236 = arith.index_cast %c7_i32 : i32 to index
    %c0_118 = arith.constant 0 : index
    %237 = vector.load %arg6[%236, %c0_118] : memref<8x32xf32, #tpu.memory_space<vmem>>, vector<1x32xf32>
    tpu.vector_store %arg6[%236, %c0_118], %235 {strides = array<i32>} : memref<8x32xf32, #tpu.memory_space<vmem>>, vector<1x32xf32>,
    %c8_i32_119 = arith.constant 8 : i32
    %c56 = arith.constant 56 : index
    %c0_120 = arith.constant 0 : index
    %238 = vector.load %arg1[%c56, %c0_120] : memref<96x128xf32, #tpu.memory_space<vmem>>, vector<32x128xf32>
    %c88 = arith.constant 88 : index
    %c0_121 = arith.constant 0 : index
    %239 = vector.load %arg1[%c88, %c0_121] : memref<96x128xf32, #tpu.memory_space<vmem>>, vector<1x128xf32>
    %c0_122 = arith.constant 0 : index
    %c0_123 = arith.constant 0 : index
    %240 = vector.load %arg6[%c0_122, %c0_123] : memref<8x32xf32, #tpu.memory_space<vmem>>, vector<8x32xf32>
    %cst_124 = arith.constant dense<0.000000e+00> : vector<8x128xf32>
    %241 = tpu.matmul %240, %238, %cst_124 {dimension_numbers = #tpu.dot_dimension_numbers<[1], [0], [0], [1], [0, 0, 1, 1], [], []>} : vector<8x32xf32>, vector<32x128xf32>, vector<8x128xf32> -> vector<8x128xf32>
    %242 = vector.broadcast %239 : vector<1x128xf32> to vector<8x128xf32>
    %243 = arith.addf %241, %242 : vector<8x128xf32>
    %c0_125 = arith.constant 0 : index
    %c0_126 = arith.constant 0 : index
    %244 = vector.load %arg2[%c0_125, %c0_126] : memref<8x128xf32, #tpu.memory_space<vmem>>, vector<8x128xf32>
    tpu.vector_store %arg2[%c0_125, %c0_126], %243 {strides = array<i32>} : memref<8x128xf32, #tpu.memory_space<vmem>>, vector<8x128xf32>,
    return
  }
}

</mosaic_0001>

<llo_original>
// kernel: tpu_custom_call.1
$region0: #{tpu_custom_call.1}
  #allocation0 [shape = 'u32[]', space=smem, size = 0x4, offset = 0x4, fixed_abs, tag = 'smem constant byte address 0x4 - core index']
  #allocation1 [shape = 'u32[72,128]{1,0:T(1,128)}', space=vmem, size = 0x9000, scoped, tag = 'internal scratch']
  #allocation2 [shape = 'f32[64,128]{1,0:T(8,128)}', space=vmem, size = 0x8000, scoped, tag = 'scratch operand']
  #allocation3 [shape = 'f32[8,32]{1,0:T(8,128)}', space=vmem, size = 0x1000, scoped, tag = 'scratch operand']
  #allocation4 [shape = 'f32[8,32]{1,0:T(8,128)}', space=vmem, size = 0x1000, scoped, tag = 'scratch operand']
  #allocation5 [shape = 'f32[8,32]{1,0:T(8,128)}', space=vmem, size = 0x1000, scoped, tag = 'scratch operand']
  %s0 = inlined_call_operand.vmem [shape: f32[64,16], index: 0, kind: input, shape index: {}]
  %s1 = inlined_call_operand.hbm [shape: f32[96,128], index: 1, kind: input, shape index: {}]
  %s2 = inlined_call_operand.hbm [shape: f32[8,128], index: 2, kind: output, shape index: {}]
  %s3 = sld [smem:[#allocation0]]
  $region22: #{tpu_custom_call.1} parent=0
    _
  %s5 = ssub.s32 1, %s3
  %s6 = scalar_select 0, %s5, %s3
  $region1: #{tpu_custom_call.1} parent=0
    #allocation6 [shape = 'u8[49152]{0}', space=vmem, size = 0xc000, scoped, tag = 'input window, operand 1, single buffered']
    #allocation7 [shape = 's32[1]{0}', space=sflag, size = 0x4, scoped, tag = 'scoped memory for tpu_custom_call.1']
    #allocation8 [shape = 's32[1]{0}', space=sflag, size = 0x4, scoped, tag = 'scoped memory for tpu_custom_call.1']
    #allocation9 [shape = 'u8[4096]{0}', space=vmem, size = 0x1000, scoped, tag = 'output window, operand 0, single buffered']
    %7 = vsyncpa [#allocation7], 0
    %8 = vsyncpa [#allocation8], 0
    // Predicated region
    $region2: #{tpu_custom_call.1} parent=1 // pred_check
      _
    $region3: #{tpu_custom_call.1} parent=1 // pred_check_branch
      %10 = sbr.rel (0) target = $region5
    $region4: #{tpu_custom_call.1} parent=1 // pred_region
      _
    $region5: #{tpu_custom_call.1} parent=1 // pred_fallthru
      _
    // Predicated region
    $region6: #{tpu_custom_call.1} parent=1 // pred_check
      _
    $region7: #{tpu_custom_call.1} parent=1 // pred_check_branch
      %12 = sbr.rel (0) target = $region9
    $region8: #{tpu_custom_call.1} parent=1 // pred_region
      %14 = vsyncadd [#allocation7], 0
      %s15 = sshll.u32 %s1, 4
      %s16 = int_to_ptr.hbm [resolvable:$true] %s15
      %s17 = sshll.u32 [#allocation6], 4
      %s18 = int_to_ptr.vmem [resolvable:$true] %s17
      %23 = dma.hbm_to_vmem [thread:$0]  %s16, 1536, %s18, [#allocation7], 128, 128, 8
    $region9: #{tpu_custom_call.1} parent=1 // pred_fallthru
      _
    // Predicated region
    $region10: #{tpu_custom_call.1} parent=1 // pred_check
      _
    $region11: #{tpu_custom_call.1} parent=1 // pred_check_branch
      %25 = sbr.rel (0) target = $region13
    $region12: #{tpu_custom_call.1} parent=1 // pred_region
      %27 = dma.done [#allocation7], 1536
    $region13: #{tpu_custom_call.1} parent=1 // pred_fallthru
      _
    %v28 = vld [vmem:[#allocation6] sm:$0xff]
    %v29 = vld [vmem:[#allocation6 + $0x8] sm:$0xff]
    %v30 = vld [vmem:[#allocation6 + $0x30] sm:$0x1]
    %v31 = vld [vmem:[%s0] sm:$0xff]
    %v32 = vld [vmem:[%s0 + $0x8] sm:$0xff]
    %v33 = vld [vmem:[%s0 + $0x10] sm:$0xff]
    %v34 = vld [vmem:[%s0 + $0x18] sm:$0xff]
    %v35 = vld [vmem:[%s0 + $0x20] sm:$0xff]
    %v36 = vld [vmem:[%s0 + $0x28] sm:$0xff]
    %v37 = vld [vmem:[%s0 + $0x30] sm:$0xff]
    %v38 = vld [vmem:[%s0 + $0x38] sm:$0xff]
    %v39 = vperm.slane %v30, 0
    %vm40 = vcmask 130048
    %v42 = vsel %vm40, %v31, 0
    %v45 = vsel %vm40, %v32, 0
    %v48 = vsel %vm40, %v33, 0
    %v51 = vsel %vm40, %v34, 0
    %v54 = vsel %vm40, %v35, 0
    %v57 = vsel %vm40, %v36, 0
    %v60 = vsel %vm40, %v37, 0
    %v63 = vsel %vm40, %v38, 0
    %65 = vmatpush.msra.mxu0 0.0
    %66 = vmatpush.msra.mxu0 0.0
    %67 = vmatpush.msra.mxu0 0.0
    %68 = vmatpush.msra.mxu0 0.0
    %69 = vmatpush.msra.mxu0 0.0
    %70 = vmatpush.msra.mxu0 0.0
    %71 = vmatpush.msra.mxu0 0.0
    %72 = vmatpush.msra.mxu0 0.0
    %73 = vmatpush.msra.mxu0 0.0
    %74 = vmatpush.msra.mxu0 0.0
    %75 = vmatpush.msra.mxu0 0.0
    %76 = vmatpush.msra.mxu0 0.0
    %77 = vmatpush.msra.mxu0 0.0
    %78 = vmatpush.msra.mxu0 0.0
    %79 = vmatpush.msra.mxu0 %v29
    %80 = vmatpush.msra.mxu0 %v28
    %81 = vmatmul.f32.gmra.mxu0 %v42
    %v82 = vpop.f32.mrf.mxu0
    %v83 = vadd.f32 %v39, %v82
    %84 = vmatmul.f32.gmra.mxu0 %v45
    %v85 = vpop.f32.mrf.mxu0
    %v86 = vadd.f32 %v39, %v85
    %87 = vmatmul.f32.gmra.mxu0 %v48
    %v88 = vpop.f32.mrf.mxu0
    %v89 = vadd.f32 %v39, %v88
    %90 = vmatmul.f32.gmra.mxu0 %v51
    %v91 = vpop.f32.mrf.mxu0
    %v92 = vadd.f32 %v39, %v91
    %93 = vmatmul.f32.gmra.mxu0 %v54
    %v94 = vpop.f32.mrf.mxu0
    %v95 = vadd.f32 %v39, %v94
    %96 = vmatmul.f32.gmra.mxu0 %v57
    %v97 = vpop.f32.mrf.mxu0
    %v98 = vadd.f32 %v39, %v97
    %99 = vmatmul.f32.gmra.mxu0 %v60
    %v100 = vpop.f32.mrf.mxu0
    %v101 = vadd.f32 %v39, %v100
    %102 = vmatmul.f32.gmra.mxu0 %v63
    %v103 = vpop.f32.mrf.mxu0
    %v104 = vadd.f32 %v39, %v103
    %105 = vdwg.mxu0
    %106 = vst [vmem:[#allocation2] sm:$0xff] %v83
    %107 = vst [vmem:[#allocation2 + $0x8] sm:$0xff] %v86
    %108 = vst [vmem:[#allocation2 + $0x10] sm:$0xff] %v89
    %109 = vst [vmem:[#allocation2 + $0x18] sm:$0xff] %v92
    %110 = vst [vmem:[#allocation2 + $0x20] sm:$0xff] %v95
    %111 = vst [vmem:[#allocation2 + $0x28] sm:$0xff] %v98
    %112 = vst [vmem:[#allocation2 + $0x30] sm:$0xff] %v101
    %113 = vst [vmem:[#allocation2 + $0x38] sm:$0xff] %v104
    %v114 = vld [vmem:[#allocation6 + $0x10] sm:$0xff]
    %v115 = vld [vmem:[#allocation6 + $0x18] sm:$0xff]
    %v116 = vld [vmem:[#allocation6 + $0x20] sm:$0xff]
    %v117 = vld [vmem:[#allocation6 + $0x28] sm:$0xff]
    %vm118 = vcmask 261120
    %119 = vst.msk [vmem:[#allocation3] sm:$0xff] %vm118, 0.0
    %120 = vst.msk [vmem:[#allocation4] sm:$0xff] %vm118, 0.0
    %121 = vst.msk [vmem:[#allocation5] sm:$0xff] %vm118, 0.0
    %v122 = vld [vmem:[#allocation3] sm:$0xff]
    %v123 = vld [vmem:[#allocation4] sm:$0xff]
    %v124 = vld [vmem:[#allocation2] sm:$0xff]
    %v126 = vsel %vm118, %v122, 0
    %128 = vmatpush.msra.mxu0 0.0
    %129 = vmatpush.msra.mxu0 0.0
    %130 = vmatpush.msra.mxu0 0.0
    %131 = vmatpush.msra.mxu0 0.0
    %132 = vmatpush.msra.mxu0 0.0
    %133 = vmatpush.msra.mxu0 0.0
    %134 = vmatpush.msra.mxu0 0.0
    %135 = vmatpush.msra.mxu0 0.0
    %136 = vmatpush.msra.mxu0 0.0
    %137 = vmatpush.msra.mxu0 0.0
    %138 = vmatpush.msra.mxu0 0.0
    %139 = vmatpush.msra.mxu0 0.0
    %140 = vmatpush.msra.mxu0 %v117
    %141 = vmatpush.msra.mxu0 %v116
    %142 = vmatpush.msra.mxu0 %v115
    %143 = vmatpush.msra.mxu0 %v114
    %144 = vmatmul.f32.gmra.mxu0 %v126
    %v145 = vpop.f32.mrf.mxu0
    %v146 = vadd.f32 0.0, %v145
    %147 = vdwg.mxu0
    %v148 = vadd.f32 %v124, %v146
    %v149 = vxor.u32 %v148, 2147483648
    %v150 = vmul.f32 %v149, 1.442695
    %v151 = vpow.pop %v150
    %v152 = vadd.f32 %v151, 1.0
    %v153 = vrcp.pop %v152
    %v154 = vmul.f32 %v152, %v153
    %v155 = vsub.f32 1.0, %v154
    %v156 = vmul.f32 %v153, %v155
    %v157 = vadd.f32 %v153, %v156
    %vm158 = vweird.f32 %v152
    %vm159 = vweird.f32 %v153
    %vm160 = vmor %vm158, %vm159
    %v161 = vsel %vm160, %v153, %v157
    %v162 = vand.u32 2147483647, %v152
    %vm163 = vcmp.eq.f32.partialorder %v162, 8.507059e+37
    %v164 = vand.u32 %v152, 2147483648
    %v165 = vor.u32 1.1754944e-38, %v164
    %v166 = vsel %vm163, %v165, %v161
    %v167 = vmul.f32 1.0, %v166
    %v168 = vtanh.pop %v148
    %v169 = vmul.f32 %v167, %v123
    %171 = vrot.lane.b32.xlu0 %v168, 96
    %v172 = vpop.permute.xlu0 %171
    %v174 = vmul.f32 %v167, %v172
    %176 = vrot.lane.b32.xlu0 %v174, 96
    %v177 = vpop.permute.xlu0 %176
    %v179 = vadd.f32 %v169, %v177
    %v180 = vtanh.pop %v179
    %182 = vrot.lane.b32.xlu0 %v180, 96
    %v183 = vpop.permute.xlu0 %182
    %v185 = vmul.f32 %v167, %v183
    %186 = vst.msk [vmem:[#allocation4] sm:$0xff] %vm118, %v179
    %188 = vrot.lane.b32.xlu0 %v185, 32
    %v189 = vpop.permute.xlu0 %188
    %191 = vst.msk [vmem:[#allocation3] sm:$0xff] %vm118, %v189
    %vm192 = vcmask 254977
    %193 = vst.msk [vmem:[#allocation5 - $0x1] sm:$0x2] %vm192, %v189
    %v194 = vld [vmem:[#allocation3] sm:$0xff]
    %v195 = vld [vmem:[#allocation4] sm:$0xff]
    %s196 = scalar_lea.vmem [#allocation2], 8
    %v197 = vld [vmem:[%s196] sm:$0xff]
    %v199 = vsel %vm118, %v194, 0
    %201 = vmatpush.msra.mxu0 0.0
    %202 = vmatpush.msra.mxu0 0.0
    %203 = vmatpush.msra.mxu0 0.0
    %204 = vmatpush.msra.mxu0 0.0
    %205 = vmatpush.msra.mxu0 0.0
    %206 = vmatpush.msra.mxu0 0.0
    %207 = vmatpush.msra.mxu0 0.0
    %208 = vmatpush.msra.mxu0 0.0
    %209 = vmatpush.msra.mxu0 0.0
    %210 = vmatpush.msra.mxu0 0.0
    %211 = vmatpush.msra.mxu0 0.0
    %212 = vmatpush.msra.mxu0 0.0
    %213 = vmatpush.msra.mxu0 %v117
    %214 = vmatpush.msra.mxu0 %v116
    %215 = vmatpush.msra.mxu0 %v115
    %216 = vmatpush.msra.mxu0 %v114
    %217 = vmatmul.f32.gmra.mxu0 %v199
    %v218 = vpop.f32.mrf.mxu0
    %v219 = vadd.f32 0.0, %v218
    %220 = vdwg.mxu0
    %v221 = vadd.f32 %v197, %v219
    %v222 = vxor.u32 %v221, 2147483648
    %v223 = vmul.f32 %v222, 1.442695
    %v224 = vpow.pop %v223
    %v225 = vadd.f32 %v224, 1.0
    %v226 = vrcp.pop %v225
    %v227 = vmul.f32 %v225, %v226
    %v228 = vsub.f32 1.0, %v227
    %v229 = vmul.f32 %v226, %v228
    %v230 = vadd.f32 %v226, %v229
    %vm231 = vweird.f32 %v225
    %vm232 = vweird.f32 %v226
    %vm233 = vmor %vm231, %vm232
    %v234 = vsel %vm233, %v226, %v230
    %v235 = vand.u32 2147483647, %v225
    %vm236 = vcmp.eq.f32.partialorder %v235, 8.507059e+37
    %v237 = vand.u32 %v225, 2147483648
    %v238 = vor.u32 1.1754944e-38, %v237
    %v239 = vsel %vm236, %v238, %v234
    %v240 = vmul.f32 1.0, %v239
    %v241 = vtanh.pop %v221
    %v242 = vmul.f32 %v240, %v195
    %244 = vrot.lane.b32.xlu0 %v241, 96
    %v245 = vpop.permute.xlu0 %244
    %v247 = vmul.f32 %v240, %v245
    %249 = vrot.lane.b32.xlu0 %v247, 96
    %v250 = vpop.permute.xlu0 %249
    %v252 = vadd.f32 %v242, %v250
    %v253 = vtanh.pop %v252
    %255 = vrot.lane.b32.xlu0 %v253, 96
    %v256 = vpop.permute.xlu0 %255
    %v258 = vmul.f32 %v240, %v256
    %259 = vst.msk [vmem:[#allocation4] sm:$0xff] %vm118, %v252
    %261 = vrot.lane.b32.xlu0 %v258, 32
    %v262 = vpop.permute.xlu0 %261
    %264 = vst.msk [vmem:[#allocation3] sm:$0xff] %vm118, %v262
    %265 = vst.msk [vmem:[#allocation5] sm:$0x2] %vm192, %v262
    %v266 = vld [vmem:[#allocation3] sm:$0xff]
    %v267 = vld [vmem:[#allocation4] sm:$0xff]
    %s268 = scalar_lea.vmem [#allocation2], 16
    %v269 = vld [vmem:[%s268] sm:$0xff]
    %v271 = vsel %vm118, %v266, 0
    %273 = vmatpush.msra.mxu0 0.0
    %274 = vmatpush.msra.mxu0 0.0
    %275 = vmatpush.msra.mxu0 0.0
    %276 = vmatpush.msra.mxu0 0.0
    %277 = vmatpush.msra.mxu0 0.0
    %278 = vmatpush.msra.mxu0 0.0
    %279 = vmatpush.msra.mxu0 0.0
    %280 = vmatpush.msra.mxu0 0.0
    %281 = vmatpush.msra.mxu0 0.0
    %282 = vmatpush.msra.mxu0 0.0
    %283 = vmatpush.msra.mxu0 0.0
    %284 = vmatpush.msra.mxu0 0.0
    %285 = vmatpush.msra.mxu0 %v117
    %286 = vmatpush.msra.mxu0 %v116
    %287 = vmatpush.msra.mxu0 %v115
    %288 = vmatpush.msra.mxu0 %v114
    %289 = vmatmul.f32.gmra.mxu0 %v271
    %v290 = vpop.f32.mrf.mxu0
    %v291 = vadd.f32 0.0, %v290
    %292 = vdwg.mxu0
    %v293 = vadd.f32 %v269, %v291
    %v294 = vxor.u32 %v293, 2147483648
    %v295 = vmul.f32 %v294, 1.442695
    %v296 = vpow.pop %v295
    %v297 = vadd.f32 %v296, 1.0
    %v298 = vrcp.pop %v297
    %v299 = vmul.f32 %v297, %v298
    %v300 = vsub.f32 1.0, %v299
    %v301 = vmul.f32 %v298, %v300
    %v302 = vadd.f32 %v298, %v301
    %vm303 = vweird.f32 %v297
    %vm304 = vweird.f32 %v298
    %vm305 = vmor %vm303, %vm304
    %v306 = vsel %vm305, %v298, %v302
    %v307 = vand.u32 2147483647, %v297
    %vm308 = vcmp.eq.f32.partialorder %v307, 8.507059e+37
    %v309 = vand.u32 %v297, 2147483648
    %v310 = vor.u32 1.1754944e-38, %v309
    %v311 = vsel %vm308, %v310, %v306
    %v312 = vmul.f32 1.0, %v311
    %v313 = vtanh.pop %v293
    %v314 = vmul.f32 %v312, %v267
    %316 = vrot.lane.b32.xlu0 %v313, 96
    %v317 = vpop.permute.xlu0 %316
    %v319 = vmul.f32 %v312, %v317
    %321 = vrot.lane.b32.xlu0 %v319, 96
    %v322 = vpop.permute.xlu0 %321
    %v324 = vadd.f32 %v314, %v322
    %v325 = vtanh.pop %v324
    %327 = vrot.lane.b32.xlu0 %v325, 96
    %v328 = vpop.permute.xlu0 %327
    %v330 = vmul.f32 %v312, %v328
    %331 = vst.msk [vmem:[#allocation4] sm:$0xff] %vm118, %v324
    %333 = vrot.lane.b32.xlu0 %v330, 32
    %v334 = vpop.permute.xlu0 %333
    %336 = vst.msk [vmem:[#allocation3] sm:$0xff] %vm118, %v334
    %337 = vst.msk [vmem:[#allocation5 + $0x1] sm:$0x2] %vm192, %v334
    %v338 = vld [vmem:[#allocation3] sm:$0xff]
    %v339 = vld [vmem:[#allocation4] sm:$0xff]
    %s340 = scalar_lea.vmem [#allocation2], 24
    %v341 = vld [vmem:[%s340] sm:$0xff]
    %v343 = vsel %vm118, %v338, 0
    %345 = vmatpush.msra.mxu0 0.0
    %346 = vmatpush.msra.mxu0 0.0
    %347 = vmatpush.msra.mxu0 0.0
    %348 = vmatpush.msra.mxu0 0.0
    %349 = vmatpush.msra.mxu0 0.0
    %350 = vmatpush.msra.mxu0 0.0
    %351 = vmatpush.msra.mxu0 0.0
    %352 = vmatpush.msra.mxu0 0.0
    %353 = vmatpush.msra.mxu0 0.0
    %354 = vmatpush.msra.mxu0 0.0
    %355 = vmatpush.msra.mxu0 0.0
    %356 = vmatpush.msra.mxu0 0.0
    %357 = vmatpush.msra.mxu0 %v117
    %358 = vmatpush.msra.mxu0 %v116
    %359 = vmatpush.msra.mxu0 %v115
    %360 = vmatpush.msra.mxu0 %v114
    %361 = vmatmul.f32.gmra.mxu0 %v343
    %v362 = vpop.f32.mrf.mxu0
    %v363 = vadd.f32 0.0, %v362
    %364 = vdwg.mxu0
    %v365 = vadd.f32 %v341, %v363
    %v366 = vxor.u32 %v365, 2147483648
    %v367 = vmul.f32 %v366, 1.442695
    %v368 = vpow.pop %v367
    %v369 = vadd.f32 %v368, 1.0
    %v370 = vrcp.pop %v369
    %v371 = vmul.f32 %v369, %v370
    %v372 = vsub.f32 1.0, %v371
    %v373 = vmul.f32 %v370, %v372
    %v374 = vadd.f32 %v370, %v373
    %vm375 = vweird.f32 %v369
    %vm376 = vweird.f32 %v370
    %vm377 = vmor %vm375, %vm376
    %v378 = vsel %vm377, %v370, %v374
    %v379 = vand.u32 2147483647, %v369
    %vm380 = vcmp.eq.f32.partialorder %v379, 8.507059e+37
    %v381 = vand.u32 %v369, 2147483648
    %v382 = vor.u32 1.1754944e-38, %v381
    %v383 = vsel %vm380, %v382, %v378
    %v384 = vmul.f32 1.0, %v383
    %v385 = vtanh.pop %v365
    %v386 = vmul.f32 %v384, %v339
    %388 = vrot.lane.b32.xlu0 %v385, 96
    %v389 = vpop.permute.xlu0 %388
    %v391 = vmul.f32 %v384, %v389
    %393 = vrot.lane.b32.xlu0 %v391, 96
    %v394 = vpop.permute.xlu0 %393
    %v396 = vadd.f32 %v386, %v394
    %v397 = vtanh.pop %v396
    %399 = vrot.lane.b32.xlu0 %v397, 96
    %v400 = vpop.permute.xlu0 %399
    %v402 = vmul.f32 %v384, %v400
    %403 = vst.msk [vmem:[#allocation4] sm:$0xff] %vm118, %v396
    %405 = vrot.lane.b32.xlu0 %v402, 32
    %v406 = vpop.permute.xlu0 %405
    %408 = vst.msk [vmem:[#allocation3] sm:$0xff] %vm118, %v406
    %409 = vst.msk [vmem:[#allocation5 + $0x2] sm:$0x2] %vm192, %v406
    %v410 = vld [vmem:[#allocation3] sm:$0xff]
    %v411 = vld [vmem:[#allocation4] sm:$0xff]
    %s412 = scalar_lea.vmem [#allocation2], 32
    %v413 = vld [vmem:[%s412] sm:$0xff]
    %v415 = vsel %vm118, %v410, 0
    %417 = vmatpush.msra.mxu0 0.0
    %418 = vmatpush.msra.mxu0 0.0
    %419 = vmatpush.msra.mxu0 0.0
    %420 = vmatpush.msra.mxu0 0.0
    %421 = vmatpush.msra.mxu0 0.0
    %422 = vmatpush.msra.mxu0 0.0
    %423 = vmatpush.msra.mxu0 0.0
    %424 = vmatpush.msra.mxu0 0.0
    %425 = vmatpush.msra.mxu0 0.0
    %426 = vmatpush.msra.mxu0 0.0
    %427 = vmatpush.msra.mxu0 0.0
    %428 = vmatpush.msra.mxu0 0.0
    %429 = vmatpush.msra.mxu0 %v117
    %430 = vmatpush.msra.mxu0 %v116
    %431 = vmatpush.msra.mxu0 %v115
    %432 = vmatpush.msra.mxu0 %v114
    %433 = vmatmul.f32.gmra.mxu0 %v415
    %v434 = vpop.f32.mrf.mxu0
    %v435 = vadd.f32 0.0, %v434
    %436 = vdwg.mxu0
    %v437 = vadd.f32 %v413, %v435
    %v438 = vxor.u32 %v437, 2147483648
    %v439 = vmul.f32 %v438, 1.442695
    %v440 = vpow.pop %v439
    %v441 = vadd.f32 %v440, 1.0
    %v442 = vrcp.pop %v441
    %v443 = vmul.f32 %v441, %v442
    %v444 = vsub.f32 1.0, %v443
    %v445 = vmul.f32 %v442, %v444
    %v446 = vadd.f32 %v442, %v445
    %vm447 = vweird.f32 %v441
    %vm448 = vweird.f32 %v442
    %vm449 = vmor %vm447, %vm448
    %v450 = vsel %vm449, %v442, %v446
    %v451 = vand.u32 2147483647, %v441
    %vm452 = vcmp.eq.f32.partialorder %v451, 8.507059e+37
    %v453 = vand.u32 %v441, 2147483648
    %v454 = vor.u32 1.1754944e-38, %v453
    %v455 = vsel %vm452, %v454, %v450
    %v456 = vmul.f32 1.0, %v455
    %v457 = vtanh.pop %v437
    %v458 = vmul.f32 %v456, %v411
    %460 = vrot.lane.b32.xlu0 %v457, 96
    %v461 = vpop.permute.xlu0 %460
    %v463 = vmul.f32 %v456, %v461
    %465 = vrot.lane.b32.xlu0 %v463, 96
    %v466 = vpop.permute.xlu0 %465
    %v468 = vadd.f32 %v458, %v466
    %v469 = vtanh.pop %v468
    %471 = vrot.lane.b32.xlu0 %v469, 96
    %v472 = vpop.permute.xlu0 %471
    %v474 = vmul.f32 %v456, %v472
    %475 = vst.msk [vmem:[#allocation4] sm:$0xff] %vm118, %v468
    %477 = vrot.lane.b32.xlu0 %v474, 32
    %v478 = vpop.permute.xlu0 %477
    %480 = vst.msk [vmem:[#allocation3] sm:$0xff] %vm118, %v478
    %481 = vst.msk [vmem:[#allocation5 + $0x3] sm:$0x2] %vm192, %v478
    %v482 = vld [vmem:[#allocation3] sm:$0xff]
    %v483 = vld [vmem:[#allocation4] sm:$0xff]
    %s484 = scalar_lea.vmem [#allocation2], 40
    %v485 = vld [vmem:[%s484] sm:$0xff]
    %v487 = vsel %vm118, %v482, 0
    %489 = vmatpush.msra.mxu0 0.0
    %490 = vmatpush.msra.mxu0 0.0
    %491 = vmatpush.msra.mxu0 0.0
    %492 = vmatpush.msra.mxu0 0.0
    %493 = vmatpush.msra.mxu0 0.0
    %494 = vmatpush.msra.mxu0 0.0
    %495 = vmatpush.msra.mxu0 0.0
    %496 = vmatpush.msra.mxu0 0.0
    %497 = vmatpush.msra.mxu0 0.0
    %498 = vmatpush.msra.mxu0 0.0
    %499 = vmatpush.msra.mxu0 0.0
    %500 = vmatpush.msra.mxu0 0.0
    %501 = vmatpush.msra.mxu0 %v117
    %502 = vmatpush.msra.mxu0 %v116
    %503 = vmatpush.msra.mxu0 %v115
    %504 = vmatpush.msra.mxu0 %v114
    %505 = vmatmul.f32.gmra.mxu0 %v487
    %v506 = vpop.f32.mrf.mxu0
    %v507 = vadd.f32 0.0, %v506
    %508 = vdwg.mxu0
    %v509 = vadd.f32 %v485, %v507
    %v510 = vxor.u32 %v509, 2147483648
    %v511 = vmul.f32 %v510, 1.442695
    %v512 = vpow.pop %v511
    %v513 = vadd.f32 %v512, 1.0
    %v514 = vrcp.pop %v513
    %v515 = vmul.f32 %v513, %v514
    %v516 = vsub.f32 1.0, %v515
    %v517 = vmul.f32 %v514, %v516
    %v518 = vadd.f32 %v514, %v517
    %vm519 = vweird.f32 %v513
    %vm520 = vweird.f32 %v514
    %vm521 = vmor %vm519, %vm520
    %v522 = vsel %vm521, %v514, %v518
    %v523 = vand.u32 2147483647, %v513
    %vm524 = vcmp.eq.f32.partialorder %v523, 8.507059e+37
    %v525 = vand.u32 %v513, 2147483648
    %v526 = vor.u32 1.1754944e-38, %v525
    %v527 = vsel %vm524, %v526, %v522
    %v528 = vmul.f32 1.0, %v527
    %v529 = vtanh.pop %v509
    %v530 = vmul.f32 %v528, %v483
    %532 = vrot.lane.b32.xlu0 %v529, 96
    %v533 = vpop.permute.xlu0 %532
    %v535 = vmul.f32 %v528, %v533
    %537 = vrot.lane.b32.xlu0 %v535, 96
    %v538 = vpop.permute.xlu0 %537
    %v540 = vadd.f32 %v530, %v538
    %v541 = vtanh.pop %v540
    %543 = vrot.lane.b32.xlu0 %v541, 96
    %v544 = vpop.permute.xlu0 %543
    %v546 = vmul.f32 %v528, %v544
    %547 = vst.msk [vmem:[#allocation4] sm:$0xff] %vm118, %v540
    %549 = vrot.lane.b32.xlu0 %v546, 32
    %v550 = vpop.permute.xlu0 %549
    %552 = vst.msk [vmem:[#allocation3] sm:$0xff] %vm118, %v550
    %553 = vst.msk [vmem:[#allocation5 + $0x4] sm:$0x2] %vm192, %v550
    %v554 = vld [vmem:[#allocation3] sm:$0xff]
    %v555 = vld [vmem:[#allocation4] sm:$0xff]
    %s556 = scalar_lea.vmem [#allocation2], 48
    %v557 = vld [vmem:[%s556] sm:$0xff]
    %v559 = vsel %vm118, %v554, 0
    %561 = vmatpush.msra.mxu0 0.0
    %562 = vmatpush.msra.mxu0 0.0
    %563 = vmatpush.msra.mxu0 0.0
    %564 = vmatpush.msra.mxu0 0.0
    %565 = vmatpush.msra.mxu0 0.0
    %566 = vmatpush.msra.mxu0 0.0
    %567 = vmatpush.msra.mxu0 0.0
    %568 = vmatpush.msra.mxu0 0.0
    %569 = vmatpush.msra.mxu0 0.0
    %570 = vmatpush.msra.mxu0 0.0
    %571 = vmatpush.msra.mxu0 0.0
    %572 = vmatpush.msra.mxu0 0.0
    %573 = vmatpush.msra.mxu0 %v117
    %574 = vmatpush.msra.mxu0 %v116
    %575 = vmatpush.msra.mxu0 %v115
    %576 = vmatpush.msra.mxu0 %v114
    %577 = vmatmul.f32.gmra.mxu0 %v559
    %v578 = vpop.f32.mrf.mxu0
    %v579 = vadd.f32 0.0, %v578
    %580 = vdwg.mxu0
    %v581 = vadd.f32 %v557, %v579
    %v582 = vxor.u32 %v581, 2147483648
    %v583 = vmul.f32 %v582, 1.442695
    %v584 = vpow.pop %v583
    %v585 = vadd.f32 %v584, 1.0
    %v586 = vrcp.pop %v585
    %v587 = vmul.f32 %v585, %v586
    %v588 = vsub.f32 1.0, %v587
    %v589 = vmul.f32 %v586, %v588
    %v590 = vadd.f32 %v586, %v589
    %vm591 = vweird.f32 %v585
    %vm592 = vweird.f32 %v586
    %vm593 = vmor %vm591, %vm592
    %v594 = vsel %vm593, %v586, %v590
    %v595 = vand.u32 2147483647, %v585
    %vm596 = vcmp.eq.f32.partialorder %v595, 8.507059e+37
    %v597 = vand.u32 %v585, 2147483648
    %v598 = vor.u32 1.1754944e-38, %v597
    %v599 = vsel %vm596, %v598, %v594
    %v600 = vmul.f32 1.0, %v599
    %v601 = vtanh.pop %v581
    %v602 = vmul.f32 %v600, %v555
    %604 = vrot.lane.b32.xlu0 %v601, 96
    %v605 = vpop.permute.xlu0 %604
    %v607 = vmul.f32 %v600, %v605
    %609 = vrot.lane.b32.xlu0 %v607, 96
    %v610 = vpop.permute.xlu0 %609
    %v612 = vadd.f32 %v602, %v610
    %v613 = vtanh.pop %v612
    %615 = vrot.lane.b32.xlu0 %v613, 96
    %v616 = vpop.permute.xlu0 %615
    %v618 = vmul.f32 %v600, %v616
    %619 = vst.msk [vmem:[#allocation4] sm:$0xff] %vm118, %v612
    %621 = vrot.lane.b32.xlu0 %v618, 32
    %v622 = vpop.permute.xlu0 %621
    %624 = vst.msk [vmem:[#allocation3] sm:$0xff] %vm118, %v622
    %625 = vst.msk [vmem:[#allocation5 + $0x5] sm:$0x2] %vm192, %v622
    %v626 = vld [vmem:[#allocation3] sm:$0xff]
    %v627 = vld [vmem:[#allocation4] sm:$0xff]
    %s628 = scalar_lea.vmem [#allocation2], 56
    %v629 = vld [vmem:[%s628] sm:$0xff]
    %v631 = vsel %vm118, %v626, 0
    %633 = vmatpush.msra.mxu0 0.0
    %634 = vmatpush.msra.mxu0 0.0
    %635 = vmatpush.msra.mxu0 0.0
    %636 = vmatpush.msra.mxu0 0.0
    %637 = vmatpush.msra.mxu0 0.0
    %638 = vmatpush.msra.mxu0 0.0
    %639 = vmatpush.msra.mxu0 0.0
    %640 = vmatpush.msra.mxu0 0.0
    %641 = vmatpush.msra.mxu0 0.0
    %642 = vmatpush.msra.mxu0 0.0
    %643 = vmatpush.msra.mxu0 0.0
    %644 = vmatpush.msra.mxu0 0.0
    %645 = vmatpush.msra.mxu0 %v117
    %646 = vmatpush.msra.mxu0 %v116
    %647 = vmatpush.msra.mxu0 %v115
    %648 = vmatpush.msra.mxu0 %v114
    %649 = vmatmul.f32.gmra.mxu0 %v631
    %v650 = vpop.f32.mrf.mxu0
    %v651 = vadd.f32 0.0, %v650
    %652 = vdwg.mxu0
    %v653 = vadd.f32 %v629, %v651
    %v654 = vxor.u32 %v653, 2147483648
    %v655 = vmul.f32 %v654, 1.442695
    %v656 = vpow.pop %v655
    %v657 = vadd.f32 %v656, 1.0
    %v658 = vrcp.pop %v657
    %v659 = vmul.f32 %v657, %v658
    %v660 = vsub.f32 1.0, %v659
    %v661 = vmul.f32 %v658, %v660
    %v662 = vadd.f32 %v658, %v661
    %vm663 = vweird.f32 %v657
    %vm664 = vweird.f32 %v658
    %vm665 = vmor %vm663, %vm664
    %v666 = vsel %vm665, %v658, %v662
    %v667 = vand.u32 2147483647, %v657
    %vm668 = vcmp.eq.f32.partialorder %v667, 8.507059e+37
    %v669 = vand.u32 %v657, 2147483648
    %v670 = vor.u32 1.1754944e-38, %v669
    %v671 = vsel %vm668, %v670, %v666
    %v672 = vmul.f32 1.0, %v671
    %v673 = vtanh.pop %v653
    %v674 = vmul.f32 %v672, %v627
    %676 = vrot.lane.b32.xlu0 %v673, 96
    %v677 = vpop.permute.xlu0 %676
    %v679 = vmul.f32 %v672, %v677
    %681 = vrot.lane.b32.xlu0 %v679, 96
    %v682 = vpop.permute.xlu0 %681
    %v684 = vadd.f32 %v674, %v682
    %v685 = vtanh.pop %v684
    %687 = vrot.lane.b32.xlu0 %v685, 96
    %v688 = vpop.permute.xlu0 %687
    %v690 = vmul.f32 %v672, %v688
    %691 = vst.msk [vmem:[#allocation4] sm:$0xff] %vm118, %v684
    %693 = vrot.lane.b32.xlu0 %v690, 32
    %v694 = vpop.permute.xlu0 %693
    %696 = vst.msk [vmem:[#allocation3] sm:$0xff] %vm118, %v694
    %697 = vst.msk [vmem:[#allocation5 + $0x6] sm:$0x2] %vm192, %v694
    %v698 = vld [vmem:[#allocation6 + $0x38] sm:$0xff]
    %v699 = vld [vmem:[#allocation6 + $0x40] sm:$0xff]
    %v700 = vld [vmem:[#allocation6 + $0x48] sm:$0xff]
    %v701 = vld [vmem:[#allocation6 + $0x50] sm:$0xff]
    %v702 = vld [vmem:[#allocation6 + $0x58] sm:$0x1]
    %v703 = vld [vmem:[#allocation5] sm:$0xff]
    %v704 = vperm.slane %v702, 0
    %v706 = vsel %vm118, %v703, 0
    %708 = vmatpush.msra.mxu0 0.0
    %709 = vmatpush.msra.mxu0 0.0
    %710 = vmatpush.msra.mxu0 0.0
    %711 = vmatpush.msra.mxu0 0.0
    %712 = vmatpush.msra.mxu0 0.0
    %713 = vmatpush.msra.mxu0 0.0
    %714 = vmatpush.msra.mxu0 0.0
    %715 = vmatpush.msra.mxu0 0.0
    %716 = vmatpush.msra.mxu0 0.0
    %717 = vmatpush.msra.mxu0 0.0
    %718 = vmatpush.msra.mxu0 0.0
    %719 = vmatpush.msra.mxu0 0.0
    %720 = vmatpush.msra.mxu0 %v701
    %721 = vmatpush.msra.mxu0 %v700
    %722 = vmatpush.msra.mxu0 %v699
    %723 = vmatpush.msra.mxu0 %v698
    %724 = vmatmul.f32.gmra.mxu0 %v706
    %v725 = vpop.f32.mrf.mxu0
    %v726 = vadd.f32 %v704, %v725
    %727 = vdwg.mxu0
    %728 = vst [vmem:[#allocation9] sm:$0xff] %v726
    // Predicated region
    $region14: #{tpu_custom_call.1} parent=1 // pred_check
      _
    $region15: #{tpu_custom_call.1} parent=1 // pred_check_branch
      %730 = sbr.rel (0) target = $region17
    $region16: #{tpu_custom_call.1} parent=1 // pred_region
      %732 = vsyncadd [#allocation8], 0
      %s734 = sshll.u32 [#allocation9], 4
      %s735 = int_to_ptr.vmem [resolvable:$true] %s734
      %s736 = sshll.u32 %s2, 4
      %s737 = int_to_ptr.hbm [resolvable:$true] %s736
      %739 = dma.vmem_to_hbm [thread:$0]  %s735, 128, %s737, [#allocation8]
    $region17: #{tpu_custom_call.1} parent=1 // pred_fallthru
      _
    // Predicated region
    $region18: #{tpu_custom_call.1} parent=1 // pred_check
      _
    $region19: #{tpu_custom_call.1} parent=1 // pred_check_branch
      %741 = sbr.rel (0) target = $region21
    $region20: #{tpu_custom_call.1} parent=1 // pred_region
      %743 = dma.done [#allocation8], 128
    $region21: #{tpu_custom_call.1} parent=1 // pred_fallthru
      _
    %744 = vsyncpa [#allocation7], 1
    %745 = vsyncpa [#allocation8], 1

</llo_original>
